<compile_context>
chip_gen: v7x
topology: tpu7x:2x2x1
jax: 0.10.0
libtpu: 0.0.40
codegen_flags: <defaults>
</compile_context>

<pallas_src>
import jax
import jax.numpy as jnp
from jax.experimental import pallas as pl
from jax.experimental.pallas import tpu as pltpu
import numpy as np


def critic_kernel(state_ref, action_ref,
                  w1_ref, b1_ref,
                  w2a_ref, w2b_ref, b2_ref,
                  w3_ref, b3_ref,
                  out_ref):
    s = state_ref[...]
    a = action_ref[...]

    # fc1 + relu (MXU)
    h1 = jnp.dot(s, w1_ref[...], preferred_element_type=jnp.float32) + b1_ref[...]
    h1 = jnp.maximum(h1, 0.0)

    # fc2 over concat([h1, action]) == h1 @ W2a + action @ W2b, then relu (MXU)
    h2 = (jnp.dot(h1, w2a_ref[...], preferred_element_type=jnp.float32)
          + jnp.dot(a, w2b_ref[...], preferred_element_type=jnp.float32)
          + b2_ref[...])
    h2 = jnp.maximum(h2, 0.0)

    # fc3: output width 1 -> do it on the VPU/XLU (multiply + lane reduction)
    # instead of a nearly-empty MXU matmul.
    w3_row = w3_ref[...]                                   # (1, fc2_units)
    q = jnp.sum(h2 * w3_row, axis=-1, keepdims=True) + b3_ref[...]
    out_ref[...] = q


def prepare_params(params):
    """One-time prep of PyTorch-layout params into kernel-ready layout.

    Do this ONCE (outside any loop): the transposes / slices / reshapes are
    ordinary XLA ops and would otherwise dominate wall-clock at these sizes.
    """
    fc1_units = params["w1"].shape[0]
    w2_t = jnp.asarray(params["w2"]).T                     # (fc1 + act, fc2)
    prepped = {
        "w1_t":   jnp.asarray(params["w1"]).T,             # (state_feats, fc1)
        "w2a_t":  w2_t[:fc1_units, :],                     # (fc1, fc2)
        "w2b_t":  w2_t[fc1_units:, :],                     # (act_feats, fc2)
        "w3_row": jnp.asarray(params["w3"]).reshape(1, -1),  # (1, fc2)
        "b1":     jnp.asarray(params["b1"]).reshape(1, -1),
        "b2":     jnp.asarray(params["b2"]).reshape(1, -1),
        "b3":     jnp.asarray(params["b3"]).reshape(1, -1),  # (1, 1)
    }
    return jax.tree_util.tree_map(jnp.asarray, prepped)


@jax.jit
def critic_forward(state, action, prepped):
    B, state_feats = state.shape
    act_feats = action.shape[1]
    fc1_units = prepped["w1_t"].shape[1]
    fc2_units = prepped["w2a_t"].shape[1]

    # Batch tiling: whole batch as one block when small; 256-row M tiles for
    # large batches (fills the 256-wide MXUs on v6e/v7x, multiple of 128 for
    # v5e). Weights/biases stay VMEM-resident across the grid (index_map 0,0).
    if B <= 256:
        bm = B
    else:
        bm = 256
    grid = (pl.cdiv(B, bm),)
    vmem = pltpu.MemorySpace.VMEM

    out = pl.pallas_call(
        critic_kernel,
        out_shape=jax.ShapeDtypeStruct((B, 1), jnp.float32),
        grid=grid,
        in_specs=[
            pl.BlockSpec((bm, state_feats), lambda i: (i, 0), memory_space=vmem),
            pl.BlockSpec((bm, act_feats), lambda i: (i, 0), memory_space=vmem),
            pl.BlockSpec((state_feats, fc1_units), lambda i: (0, 0), memory_space=vmem),
            pl.BlockSpec((1, fc1_units), lambda i: (0, 0), memory_space=vmem),
            pl.BlockSpec((fc1_units, fc2_units), lambda i: (0, 0), memory_space=vmem),
            pl.BlockSpec((act_feats, fc2_units), lambda i: (0, 0), memory_space=vmem),
            pl.BlockSpec((1, fc2_units), lambda i: (0, 0), memory_space=vmem),
            pl.BlockSpec((1, fc2_units), lambda i: (0, 0), memory_space=vmem),
            pl.BlockSpec((1, 1), lambda i: (0, 0), memory_space=vmem),
        ],
        out_specs=pl.BlockSpec((bm, 1), lambda i: (i, 0), memory_space=vmem),
        compiler_params=pltpu.CompilerParams(
            dimension_semantics=("parallel",)),
    )(state, action,
      prepped["w1_t"], prepped["b1"],
      prepped["w2a_t"], prepped["w2b_t"], prepped["b2"],
      prepped["w3_row"], prepped["b3"])
    return out


def init_params(key, state_feats, act_feats, fc1_units, fc2_units):
    """Deterministic init matching PyTorch Linear default U(-1/sqrt(fan_in), ...)."""
    ks = jax.random.split(key, 6)

    def unif(k, shape, fan_in):
        lim = 1.0 / np.sqrt(fan_in)
        return jax.random.uniform(k, shape, jnp.float32, -lim, lim)

    in2 = fc1_units + act_feats
    return {
        "w1": unif(ks[0], (fc1_units, state_feats), state_feats),
        "b1": unif(ks[1], (fc1_units,), state_feats),
        "w2": unif(ks[2], (fc2_units, in2), in2),
        "b2": unif(ks[3], (fc2_units,), in2),
        "w3": unif(ks[4], (1, fc2_units), fc2_units),
        "b3": unif(ks[5], (1,), fc2_units),
    }


def reference_forward(state, action, params):
    h1 = jnp.maximum(state @ params["w1"].T + params["b1"], 0.0)
    x = jnp.concatenate([h1, action], axis=1)
    h2 = jnp.maximum(x @ params["w2"].T + params["b2"], 0.0)
    return h2 @ params["w3"].T + params["b3"]


if __name__ == "__main__":
    # Small shapes consistent with the module: state_size=8, action_size=4
    # => state feature dim = 16, action feature dim = 8; lane-aligned fc sizes.
    B = 8
    state_size, action_size = 8, 4
    fc1_units, fc2_units = 128, 128

    key = jax.random.PRNGKey(0)
    k_s, k_a, k_p = jax.random.split(key, 3)

    state = jax.random.normal(k_s, (B, state_size * 2), jnp.float32)
    action = jax.random.normal(k_a, (B, action_size * 2), jnp.float32)
    params = init_params(k_p, state_size * 2, action_size * 2, fc1_units, fc2_units)

    # One-time weight prep (hoisted out of the per-call path).
    prepped = prepare_params(params)
    prepped = jax.block_until_ready(prepped)

    out = critic_forward(state, action, prepped)
    out = jax.block_until_ready(out)

    ref = reference_forward(state, action, params)
    np.testing.assert_allclose(np.asarray(out), np.asarray(ref), rtol=1e-5, atol=1e-5)

    print("KERNEL_OK")
</pallas_src>

<mosaic_0001>
module attributes {stable_mosaic.version = 11 : i64} {
  func.func @critic_kernel(%arg0: i32, %arg1: memref<8x16xf32, #tpu.memory_space<vmem>>, %arg2: memref<8x8xf32, #tpu.memory_space<vmem>>, %arg3: memref<16x128xf32, #tpu.memory_space<vmem>>, %arg4: memref<1x128xf32, #tpu.memory_space<vmem>>, %arg5: memref<128x128xf32, #tpu.memory_space<vmem>>, %arg6: memref<8x128xf32, #tpu.memory_space<vmem>>, %arg7: memref<1x128xf32, #tpu.memory_space<vmem>>, %arg8: memref<1x128xf32, #tpu.memory_space<vmem>>, %arg9: memref<1x1xf32, #tpu.memory_space<vmem>>, %arg10: memref<8x1xf32, #tpu.memory_space<vmem>>) attributes {dimension_semantics = [#tpu.dimension_semantics<parallel>], iteration_bounds = array<i64: 1>, scalar_prefetch = 0 : i64, scratch_operands = 0 : i64, tpu.core_type = #tpu.core_type<tc>, window_params = [{transform_indices = @transform_0, window_bounds = array<i64: 8, 16>}, {transform_indices = @transform_1, window_bounds = array<i64: 8, 8>}, {pipeline_mode = #tpu.pipeline_mode<synchronous>, transform_indices = @transform_2, window_bounds = array<i64: 16, 128>}, {pipeline_mode = #tpu.pipeline_mode<synchronous>, transform_indices = @transform_3, window_bounds = array<i64: 1, 128>}, {pipeline_mode = #tpu.pipeline_mode<synchronous>, transform_indices = @transform_4, window_bounds = array<i64: 128, 128>}, {pipeline_mode = #tpu.pipeline_mode<synchronous>, transform_indices = @transform_5, window_bounds = array<i64: 8, 128>}, {pipeline_mode = #tpu.pipeline_mode<synchronous>, transform_indices = @transform_6, window_bounds = array<i64: 1, 128>}, {pipeline_mode = #tpu.pipeline_mode<synchronous>, transform_indices = @transform_7, window_bounds = array<i64: 1, 128>}, {pipeline_mode = #tpu.pipeline_mode<synchronous>, transform_indices = @transform_8, window_bounds = array<i64: 1, 1>}, {transform_indices = @transform_9, window_bounds = array<i64: 8, 1>}]} {
    %c0 = arith.constant 0 : index
    %c0_0 = arith.constant 0 : index
    %0 = vector.load %arg1[%c0, %c0_0] : memref<8x16xf32, #tpu.memory_space<vmem>>, vector<8x16xf32>
    %c0_1 = arith.constant 0 : index
    %c0_2 = arith.constant 0 : index
    %1 = vector.load %arg2[%c0_1, %c0_2] : memref<8x8xf32, #tpu.memory_space<vmem>>, vector<8x8xf32>
    %c0_3 = arith.constant 0 : index
    %c0_4 = arith.constant 0 : index
    %2 = vector.load %arg3[%c0_3, %c0_4] : memref<16x128xf32, #tpu.memory_space<vmem>>, vector<16x128xf32>
    %cst = arith.constant dense<0.000000e+00> : vector<8x128xf32>
    %3 = tpu.matmul %0, %2, %cst {dimension_numbers = #tpu.dot_dimension_numbers<[1], [0], [0], [1], [0, 0, 1, 1], [], []>} : vector<8x16xf32>, vector<16x128xf32>, vector<8x128xf32> -> vector<8x128xf32>
    %c0_5 = arith.constant 0 : index
    %c0_6 = arith.constant 0 : index
    %4 = vector.load %arg4[%c0_5, %c0_6] : memref<1x128xf32, #tpu.memory_space<vmem>>, vector<1x128xf32>
    %5 = vector.broadcast %4 : vector<1x128xf32> to vector<8x128xf32>
    %6 = arith.addf %3, %5 : vector<8x128xf32>
    %cst_7 = arith.constant 0.000000e+00 : f32
    %7 = vector.broadcast %cst_7 : f32 to vector<8x128xf32>
    %8 = arith.maximumf %6, %7 : vector<8x128xf32>
    %c0_8 = arith.constant 0 : index
    %c0_9 = arith.constant 0 : index
    %9 = vector.load %arg5[%c0_8, %c0_9] : memref<128x128xf32, #tpu.memory_space<vmem>>, vector<128x128xf32>
    %cst_10 = arith.constant dense<0.000000e+00> : vector<8x128xf32>
    %10 = tpu.matmul %8, %9, %cst_10 {dimension_numbers = #tpu.dot_dimension_numbers<[1], [0], [0], [1], [0, 0, 1, 1], [], []>} : vector<8x128xf32>, vector<128x128xf32>, vector<8x128xf32> -> vector<8x128xf32>
    %c0_11 = arith.constant 0 : index
    %c0_12 = arith.constant 0 : index
    %11 = vector.load %arg6[%c0_11, %c0_12] : memref<8x128xf32, #tpu.memory_space<vmem>>, vector<8x128xf32>
    %cst_13 = arith.constant dense<0.000000e+00> : vector<8x128xf32>
    %12 = tpu.matmul %1, %11, %cst_13 {dimension_numbers = #tpu.dot_dimension_numbers<[1], [0], [0], [1], [0, 0, 1, 1], [], []>} : vector<8x8xf32>, vector<8x128xf32>, vector<8x128xf32> -> vector<8x128xf32>
    %13 = arith.addf %10, %12 : vector<8x128xf32>
    %c0_14 = arith.constant 0 : index
    %c0_15 = arith.constant 0 : index
    %14 = vector.load %arg7[%c0_14, %c0_15] : memref<1x128xf32, #tpu.memory_space<vmem>>, vector<1x128xf32>
    %15 = vector.broadcast %14 : vector<1x128xf32> to vector<8x128xf32>
    %16 = arith.addf %13, %15 : vector<8x128xf32>
    %cst_16 = arith.constant 0.000000e+00 : f32
    %17 = vector.broadcast %cst_16 : f32 to vector<8x128xf32>
    %18 = arith.maximumf %16, %17 : vector<8x128xf32>
    %c0_17 = arith.constant 0 : index
    %c0_18 = arith.constant 0 : index
    %19 = vector.load %arg8[%c0_17, %c0_18] : memref<1x128xf32, #tpu.memory_space<vmem>>, vector<1x128xf32>
    %20 = vector.broadcast %19 : vector<1x128xf32> to vector<8x128xf32>
    %21 = arith.mulf %18, %20 : vector<8x128xf32>
    %cst_19 = arith.constant dense<0.000000e+00> : vector<8xf32>
    %22 = vector.multi_reduction <add>, %21, %cst_19 [1] : vector<8x128xf32> to vector<8xf32>
    %23 = vector.shape_cast %22 : vector<8xf32> to vector<8x1xf32>
    %c0_20 = arith.constant 0 : index
    %c0_21 = arith.constant 0 : index
    %24 = vector.load %arg9[%c0_20, %c0_21] : memref<1x1xf32, #tpu.memory_space<vmem>>, vector<1x1xf32>
    %25 = vector.broadcast %24 : vector<1x1xf32> to vector<8x1xf32>
    %26 = arith.addf %23, %25 : vector<8x1xf32>
    %c0_22 = arith.constant 0 : index
    %c0_23 = arith.constant 0 : index
    %27 = vector.load %arg10[%c0_22, %c0_23] : memref<8x1xf32, #tpu.memory_space<vmem>>, vector<8x1xf32>
    tpu.vector_store %arg10[%c0_22, %c0_23], %26 {strides = array<i32>} : memref<8x1xf32, #tpu.memory_space<vmem>>, vector<8x1xf32>,
    return
  }
  func.func @transform_0(%arg0: i32) -> (i32, i32) {
    %c0_i32 = arith.constant 0 : i32
    %c0_i32_0 = arith.constant 0 : i32
    return %arg0, %c0_i32 : i32, i32
  }
  func.func @transform_1(%arg0: i32) -> (i32, i32) {
    %c0_i32 = arith.constant 0 : i32
    %c0_i32_0 = arith.constant 0 : i32
    return %arg0, %c0_i32 : i32, i32
  }
  func.func @transform_2(%arg0: i32) -> (i32, i32) {
    %c0_i32 = arith.constant 0 : i32
    %c0_i32_0 = arith.constant 0 : i32
    %c0_i32_1 = arith.constant 0 : i32
    return %c0_i32, %c0_i32_0 : i32, i32
  }
  func.func @transform_3(%arg0: i32) -> (i32, i32) {
    %c0_i32 = arith.constant 0 : i32
    %c0_i32_0 = arith.constant 0 : i32
    %c0_i32_1 = arith.constant 0 : i32
    return %c0_i32, %c0_i32_0 : i32, i32
  }
  func.func @transform_4(%arg0: i32) -> (i32, i32) {
    %c0_i32 = arith.constant 0 : i32
    %c0_i32_0 = arith.constant 0 : i32
    %c0_i32_1 = arith.constant 0 : i32
    return %c0_i32, %c0_i32_0 : i32, i32
  }
  func.func @transform_5(%arg0: i32) -> (i32, i32) {
    %c0_i32 = arith.constant 0 : i32
    %c0_i32_0 = arith.constant 0 : i32
    %c0_i32_1 = arith.constant 0 : i32
    return %c0_i32, %c0_i32_0 : i32, i32
  }
  func.func @transform_6(%arg0: i32) -> (i32, i32) {
    %c0_i32 = arith.constant 0 : i32
    %c0_i32_0 = arith.constant 0 : i32
    %c0_i32_1 = arith.constant 0 : i32
    return %c0_i32, %c0_i32_0 : i32, i32
  }
  func.func @transform_7(%arg0: i32) -> (i32, i32) {
    %c0_i32 = arith.constant 0 : i32
    %c0_i32_0 = arith.constant 0 : i32
    %c0_i32_1 = arith.constant 0 : i32
    return %c0_i32, %c0_i32_0 : i32, i32
  }
  func.func @transform_8(%arg0: i32) -> (i32, i32) {
    %c0_i32 = arith.constant 0 : i32
    %c0_i32_0 = arith.constant 0 : i32
    %c0_i32_1 = arith.constant 0 : i32
    return %c0_i32, %c0_i32_0 : i32, i32
  }
  func.func @transform_9(%arg0: i32) -> (i32, i32) {
    %c0_i32 = arith.constant 0 : i32
    %c0_i32_0 = arith.constant 0 : i32
    return %arg0, %c0_i32 : i32, i32
  }
}

</mosaic_0001>

<llo_original>
// kernel: critic_forward.1
$region0: #{critic_forward.1}
  #allocation0 [shape = 'u32[]', space=smem, size = 0x4, offset = 0x4, fixed_abs, tag = 'smem constant byte address 0x4 - core index']
  #allocation1 [shape = 'u32[144,128]{1,0:T(1,128)}', space=vmem, size = 0x12000, scoped, tag = 'internal scratch']
  #allocation2 [shape = 'f32[1,1]{1,0:T(1,128)S(1)}', space=vmem, size = 0x200, scoped, tag = 'scoped memory for critic_forward.1']
  %s0 = inlined_call_operand.hbm [shape: f32[8,16], index: 0, kind: input, shape index: {}]
  %s1 = inlined_call_operand.hbm [shape: f32[8,8], index: 1, kind: input, shape index: {}]
  %s2 = inlined_call_operand.vmem [shape: f32[16,128], index: 2, kind: input, shape index: {}]
  %s3 = inlined_call_operand.vmem [shape: f32[1,128], index: 3, kind: input, shape index: {}]
  %s4 = inlined_call_operand.hbm [shape: f32[128,128], index: 4, kind: input, shape index: {}]
  %s5 = inlined_call_operand.vmem [shape: f32[8,128], index: 5, kind: input, shape index: {}]
  %s6 = inlined_call_operand.vmem [shape: f32[1,128], index: 6, kind: input, shape index: {}]
  %s7 = inlined_call_operand.vmem [shape: f32[1,128], index: 7, kind: input, shape index: {}]
  %s8 = inlined_call_operand.<no memory space> [shape: f32[1,1], index: 8, kind: input, shape index: {}]
  %s9 = inlined_call_operand.vmem [shape: f32[8,1], index: 9, kind: output, shape index: {}]
  %s10 = sld [smem:[#allocation0]]
  $region58: #{critic_forward.1} parent=0
    _
  %s12 = ssub.s32 1, %s10
  %s13 = scalar_select 0, %s12, %s10
  %v14 = vstv %s8
  %15 = vst [vmem:[#allocation2] sm:$0x1] %v14
  $region1: #{critic_forward.1} parent=0
    #allocation3 [shape = 'u8[4096]{0}', space=vmem, size = 0x1000, scoped, tag = 'input window, operand 0, single buffered']
    #allocation4 [shape = 's32[1]{0}', space=sflag, size = 0x4, scoped, tag = 'scoped memory for critic_forward.1']
    #allocation5 [shape = 'u8[4096]{0}', space=vmem, size = 0x1000, scoped, tag = 'input window, operand 1, single buffered']
    #allocation6 [shape = 's32[1]{0}', space=sflag, size = 0x4, scoped, tag = 'scoped memory for critic_forward.1']
    #allocation7 [shape = 'u8[65536]{0}', space=vmem, size = 0x10000, scoped, tag = 'input window, operand 4, single buffered']
    %16 = vsyncpa [#allocation4], 0
    %17 = vsyncpa [#allocation6], 0
    // Predicated region
    $region2: #{critic_forward.1} parent=1 // pred_check
      _
    $region3: #{critic_forward.1} parent=1 // pred_check_branch
      %19 = sbr.rel (0) target = $region5
    $region4: #{critic_forward.1} parent=1 // pred_region
      %s21 = ssub.s32 128, 128
      %22 = vsyncadd [#allocation4], %s21
      %s24 = sshll.u32 [#allocation3], 4
      %s25 = int_to_ptr.vmem [resolvable:$true] %s24
      %27 = dma.hbm_to_vmem [thread:$0]  %s0, 128, %s25, [#allocation4]
    $region5: #{critic_forward.1} parent=1 // pred_fallthru
      _
    // Predicated region
    $region6: #{critic_forward.1} parent=1 // pred_check
      _
    $region7: #{critic_forward.1} parent=1 // pred_check_branch
      %29 = sbr.rel (0) target = $region9
    $region8: #{critic_forward.1} parent=1 // pred_region
      %s31 = ssub.s32 128, 128
      %32 = vsyncadd [#allocation6], %s31
      %s34 = sshll.u32 [#allocation5], 4
      %s35 = int_to_ptr.vmem [resolvable:$true] %s34
      %37 = dma.hbm_to_vmem [thread:$0]  %s1, 128, %s35, [#allocation6]
    $region9: #{critic_forward.1} parent=1 // pred_fallthru
      _
    // Predicated region
    $region10: #{critic_forward.1} parent=1 // pred_check
      _
    $region11: #{critic_forward.1} parent=1 // pred_check_branch
      %39 = sbr.rel (0) target = $region13
    $region12: #{critic_forward.1} parent=1 // pred_region
      _
    $region13: #{critic_forward.1} parent=1 // pred_fallthru
      _
    // Predicated region
    $region14: #{critic_forward.1} parent=1 // pred_check
      _
    $region15: #{critic_forward.1} parent=1 // pred_check_branch
      %41 = sbr.rel (0) target = $region17
    $region16: #{critic_forward.1} parent=1 // pred_region
      _
    $region17: #{critic_forward.1} parent=1 // pred_fallthru
      _
    // Predicated region
    $region18: #{critic_forward.1} parent=1 // pred_check
      _
    $region19: #{critic_forward.1} parent=1 // pred_check_branch
      %43 = sbr.rel (0) target = $region21
    $region20: #{critic_forward.1} parent=1 // pred_region
      %s45 = ssub.s32 2048, 2048
      %46 = vsyncadd [#allocation6], %s45
      %s47 = sshll.u32 [#allocation7], 4
      %s48 = int_to_ptr.vmem [resolvable:$true] %s47
      %53 = dma.hbm_to_vmem [thread:$0]  %s4, 2048, %s48, [#allocation6], 128, 128, 8
    $region21: #{critic_forward.1} parent=1 // pred_fallthru
      _
    // Predicated region
    $region22: #{critic_forward.1} parent=1 // pred_check
      _
    $region23: #{critic_forward.1} parent=1 // pred_check_branch
      %55 = sbr.rel (0) target = $region25
    $region24: #{critic_forward.1} parent=1 // pred_region
      _
    $region25: #{critic_forward.1} parent=1 // pred_fallthru
      _
    // Predicated region
    $region26: #{critic_forward.1} parent=1 // pred_check
      _
    $region27: #{critic_forward.1} parent=1 // pred_check_branch
      %57 = sbr.rel (0) target = $region29
    $region28: #{critic_forward.1} parent=1 // pred_region
      _
    $region29: #{critic_forward.1} parent=1 // pred_fallthru
      _
    // Predicated region
    $region30: #{critic_forward.1} parent=1 // pred_check
      _
    $region31: #{critic_forward.1} parent=1 // pred_check_branch
      %59 = sbr.rel (0) target = $region33
    $region32: #{critic_forward.1} parent=1 // pred_region
      _
    $region33: #{critic_forward.1} parent=1 // pred_fallthru
      _
    // Predicated region
    $region34: #{critic_forward.1} parent=1 // pred_check
      _
    $region35: #{critic_forward.1} parent=1 // pred_check_branch
      %61 = sbr.rel (0) target = $region37
    $region36: #{critic_forward.1} parent=1 // pred_region
      _
    $region37: #{critic_forward.1} parent=1 // pred_fallthru
      _
    // Predicated region
    $region38: #{critic_forward.1} parent=1 // pred_check
      _
    $region39: #{critic_forward.1} parent=1 // pred_check_branch
      %63 = sbr.rel (0) target = $region41
    $region40: #{critic_forward.1} parent=1 // pred_region
      %64 = dma.done [#allocation4], 128
    $region41: #{critic_forward.1} parent=1 // pred_fallthru
      _
    // Predicated region
    $region42: #{critic_forward.1} parent=1 // pred_check
      _
    $region43: #{critic_forward.1} parent=1 // pred_check_branch
      %66 = sbr.rel (0) target = $region45
    $region44: #{critic_forward.1} parent=1 // pred_region
      %67 = dma.done [#allocation6], 128
    $region45: #{critic_forward.1} parent=1 // pred_fallthru
      _
    // Predicated region
    $region46: #{critic_forward.1} parent=1 // pred_check
      _
    $region47: #{critic_forward.1} parent=1 // pred_check_branch
      %69 = sbr.rel (0) target = $region49
    $region48: #{critic_forward.1} parent=1 // pred_region
      %70 = dma.done [#allocation6], 2048
    $region49: #{critic_forward.1} parent=1 // pred_fallthru
      _
    %v71 = vld [vmem:[#allocation3] sm:$0xff]
    %v72 = vld [vmem:[#allocation5] sm:$0xff]
    %v73 = vld [vmem:[%s2] sm:$0xff]
    %v74 = vld [vmem:[%s2 + $0x8] sm:$0xff]
    %v75 = vld [vmem:[%s3] sm:$0x1]
    %v77 = vlaneseq
    %v78 = vshrl.u32 %v77, 7
    %v79 = vsub.s32 0, %v78
    %v80 = vrot.slane %v75, %v79
    %vm82 = vcmask 130048
    %v84 = vsel %vm82, %v71, 0
    %86 = vmatprep.subr.mxu0 0.0
    %87 = vmatpush1.msra.mxu0 %v73
    %88 = vmatprep.subr.mxu0 0.0
    %89 = vmatpush1.msra.mxu0 %v74
    %90 = vmatprep.subr.mxu0 0.0
    %91 = vmatpush1.msra.mxu0 0.0
    %92 = vmatprep.subr.mxu0 0.0
    %93 = vmatpush1.msra.mxu0 0.0
    %94 = vmatprep.subr.mxu0 0.0
    %95 = vmatpush1.msra.mxu0 0.0
    %96 = vmatprep.subr.mxu0 0.0
    %97 = vmatpush1.msra.mxu0 0.0
    %98 = vmatprep.subr.mxu0 0.0
    %99 = vmatpush1.msra.mxu0 0.0
    %100 = vmatprep.subr.mxu0 0.0
    %101 = vmatpush1.msra.mxu0 0.0
    %102 = vmatprep.subr.mxu0 0.0
    %103 = vmatpush1.msra.mxu0 0.0
    %104 = vmatprep.subr.mxu0 0.0
    %105 = vmatpush1.msra.mxu0 0.0
    %106 = vmatprep.subr.mxu0 0.0
    %107 = vmatpush1.msra.mxu0 0.0
    %108 = vmatprep.subr.mxu0 0.0
    %109 = vmatpush1.msra.mxu0 0.0
    %110 = vmatprep.subr.mxu0 0.0
    %111 = vmatpush1.msra.mxu0 0.0
    %112 = vmatprep.subr.mxu0 0.0
    %113 = vmatpush1.msra.mxu0 0.0
    %114 = vmatprep.subr.mxu0 0.0
    %115 = vmatpush1.msra.mxu0 0.0
    %116 = vmatprep.subr.mxu0 0.0
    %117 = vmatpush1.msra.mxu0 0.0
    %118 = vmatprep.subr.mxu0 0.0
    %119 = vmatpush1.msra.mxu0 0.0
    %120 = vmatprep.subr.mxu0 0.0
    %121 = vmatpush1.msra.mxu0 0.0
    %122 = vmatprep.subr.mxu0 0.0
    %123 = vmatpush1.msra.mxu0 0.0
    %124 = vmatprep.subr.mxu0 0.0
    %125 = vmatpush1.msra.mxu0 0.0
    %126 = vmatprep.subr.mxu0 0.0
    %127 = vmatpush1.msra.mxu0 0.0
    %128 = vmatprep.subr.mxu0 0.0
    %129 = vmatpush1.msra.mxu0 0.0
    %130 = vmatprep.subr.mxu0 0.0
    %131 = vmatpush1.msra.mxu0 0.0
    %132 = vmatprep.subr.mxu0 0.0
    %133 = vmatpush1.msra.mxu0 0.0
    %134 = vmatprep.subr.mxu0 0.0
    %135 = vmatpush1.msra.mxu0 0.0
    %136 = vmatprep.subr.mxu0 0.0
    %137 = vmatpush1.msra.mxu0 0.0
    %138 = vmatprep.subr.mxu0 0.0
    %139 = vmatpush1.msra.mxu0 0.0
    %140 = vmatprep.subr.mxu0 0.0
    %141 = vmatpush1.msra.mxu0 0.0
    %142 = vmatprep.subr.mxu0 0.0
    %143 = vmatpush1.msra.mxu0 0.0
    %144 = vmatprep.subr.mxu0 0.0
    %145 = vmatpush1.msra.mxu0 0.0
    %146 = vmatprep.subr.mxu0 0.0
    %147 = vmatpush1.msra.mxu0 0.0
    %148 = vmatprep.subr.mxu0 0.0
    %149 = vmatpush1.msra.mxu0 0.0
    %150 = vmatprep.mubr.f32.mxu0 0.0
    %151 = vmatmul.mubr.f32.gmra.mrb[0].mxu0 %v84
    %v152 = vpop.f32.mrb[0].mxu0
    %v153 = vadd.f32 %v80, %v152
    %v154 = vpop.f32.mrb[0].mxu0
    %155 = vdwg.mxu0
    %v156 = vmax.f32 %v153, 0.0
    %v157 = vld [vmem:[#allocation7] sm:$0xff]
    %v158 = vld [vmem:[#allocation7 + $0x8] sm:$0xff]
    %v159 = vld [vmem:[#allocation7 + $0x10] sm:$0xff]
    %v160 = vld [vmem:[#allocation7 + $0x18] sm:$0xff]
    %v161 = vld [vmem:[#allocation7 + $0x20] sm:$0xff]
    %v162 = vld [vmem:[#allocation7 + $0x28] sm:$0xff]
    %v163 = vld [vmem:[#allocation7 + $0x30] sm:$0xff]
    %v164 = vld [vmem:[#allocation7 + $0x38] sm:$0xff]
    %v165 = vld [vmem:[#allocation7 + $0x40] sm:$0xff]
    %v166 = vld [vmem:[#allocation7 + $0x48] sm:$0xff]
    %v167 = vld [vmem:[#allocation7 + $0x50] sm:$0xff]
    %v168 = vld [vmem:[#allocation7 + $0x58] sm:$0xff]
    %v169 = vld [vmem:[#allocation7 + $0x60] sm:$0xff]
    %v170 = vld [vmem:[#allocation7 + $0x68] sm:$0xff]
    %v171 = vld [vmem:[#allocation7 + $0x70] sm:$0xff]
    %v172 = vld [vmem:[#allocation7 + $0x78] sm:$0xff]
    %v173 = vld [vmem:[%s5] sm:$0xff]
    %vm174 = vcmask 64512
    %v176 = vsel %vm174, %v72, 0
    %178 = vmatprep.subr.mxu0 0.0
    %179 = vmatpush1.msra.mxu0 %v173
    %180 = vmatprep.subr.mxu0 0.0
    %181 = vmatpush1.msra.mxu0 0.0
    %182 = vmatprep.subr.mxu0 0.0
    %183 = vmatpush1.msra.mxu0 0.0
    %184 = vmatprep.subr.mxu0 0.0
    %185 = vmatpush1.msra.mxu0 0.0
    %186 = vmatprep.subr.mxu0 0.0
    %187 = vmatpush1.msra.mxu0 0.0
    %188 = vmatprep.subr.mxu0 0.0
    %189 = vmatpush1.msra.mxu0 0.0
    %190 = vmatprep.subr.mxu0 0.0
    %191 = vmatpush1.msra.mxu0 0.0
    %192 = vmatprep.subr.mxu0 0.0
    %193 = vmatpush1.msra.mxu0 0.0
    %194 = vmatprep.subr.mxu0 0.0
    %195 = vmatpush1.msra.mxu0 0.0
    %196 = vmatprep.subr.mxu0 0.0
    %197 = vmatpush1.msra.mxu0 0.0
    %198 = vmatprep.subr.mxu0 0.0
    %199 = vmatpush1.msra.mxu0 0.0
    %200 = vmatprep.subr.mxu0 0.0
    %201 = vmatpush1.msra.mxu0 0.0
    %202 = vmatprep.subr.mxu0 0.0
    %203 = vmatpush1.msra.mxu0 0.0
    %204 = vmatprep.subr.mxu0 0.0
    %205 = vmatpush1.msra.mxu0 0.0
    %206 = vmatprep.subr.mxu0 0.0
    %207 = vmatpush1.msra.mxu0 0.0
    %208 = vmatprep.subr.mxu0 0.0
    %209 = vmatpush1.msra.mxu0 0.0
    %210 = vmatprep.subr.mxu0 0.0
    %211 = vmatpush1.msra.mxu0 0.0
    %212 = vmatprep.subr.mxu0 0.0
    %213 = vmatpush1.msra.mxu0 0.0
    %214 = vmatprep.subr.mxu0 0.0
    %215 = vmatpush1.msra.mxu0 0.0
    %216 = vmatprep.subr.mxu0 0.0
    %217 = vmatpush1.msra.mxu0 0.0
    %218 = vmatprep.subr.mxu0 0.0
    %219 = vmatpush1.msra.mxu0 0.0
    %220 = vmatprep.subr.mxu0 0.0
    %221 = vmatpush1.msra.mxu0 0.0
    %222 = vmatprep.subr.mxu0 0.0
    %223 = vmatpush1.msra.mxu0 0.0
    %224 = vmatprep.subr.mxu0 0.0
    %225 = vmatpush1.msra.mxu0 0.0
    %226 = vmatprep.subr.mxu0 0.0
    %227 = vmatpush1.msra.mxu0 0.0
    %228 = vmatprep.subr.mxu0 0.0
    %229 = vmatpush1.msra.mxu0 0.0
    %230 = vmatprep.subr.mxu0 0.0
    %231 = vmatpush1.msra.mxu0 0.0
    %232 = vmatprep.subr.mxu0 0.0
    %233 = vmatpush1.msra.mxu0 0.0
    %234 = vmatprep.subr.mxu0 0.0
    %235 = vmatpush1.msra.mxu0 0.0
    %236 = vmatprep.subr.mxu0 0.0
    %237 = vmatpush1.msra.mxu0 0.0
    %238 = vmatprep.subr.mxu0 0.0
    %239 = vmatpush1.msra.mxu0 0.0
    %240 = vmatprep.subr.mxu0 0.0
    %241 = vmatpush1.msra.mxu0 0.0
    %242 = vmatprep.mubr.f32.mxu0 0.0
    %243 = vmatmul.mubr.f32.gmra.mrb[0].mxu0 %v176
    %v244 = vpop.f32.mrb[0].mxu0
    %v245 = vadd.f32 0.0, %v244
    %v246 = vpop.f32.mrb[0].mxu0
    %247 = vdwg.mxu0
    %248 = vmatprep.subr.mxu0 0.0
    %249 = vmatpush1.msra.mxu0 %v157
    %250 = vmatprep.subr.mxu0 0.0
    %251 = vmatpush1.msra.mxu0 %v158
    %252 = vmatprep.subr.mxu0 0.0
    %253 = vmatpush1.msra.mxu0 %v159
    %254 = vmatprep.subr.mxu0 0.0
    %255 = vmatpush1.msra.mxu0 %v160
    %256 = vmatprep.subr.mxu0 0.0
    %257 = vmatpush1.msra.mxu0 %v161
    %258 = vmatprep.subr.mxu0 0.0
    %259 = vmatpush1.msra.mxu0 %v162
    %260 = vmatprep.subr.mxu0 0.0
    %261 = vmatpush1.msra.mxu0 %v163
    %262 = vmatprep.subr.mxu0 0.0
    %263 = vmatpush1.msra.mxu0 %v164
    %264 = vmatprep.subr.mxu0 0.0
    %265 = vmatpush1.msra.mxu0 %v165
    %266 = vmatprep.subr.mxu0 0.0
    %267 = vmatpush1.msra.mxu0 %v166
    %268 = vmatprep.subr.mxu0 0.0
    %269 = vmatpush1.msra.mxu0 %v167
    %270 = vmatprep.subr.mxu0 0.0
    %271 = vmatpush1.msra.mxu0 %v168
    %272 = vmatprep.subr.mxu0 0.0
    %273 = vmatpush1.msra.mxu0 %v169
    %274 = vmatprep.subr.mxu0 0.0
    %275 = vmatpush1.msra.mxu0 %v170
    %276 = vmatprep.subr.mxu0 0.0
    %277 = vmatpush1.msra.mxu0 %v171
    %278 = vmatprep.subr.mxu0 0.0
    %279 = vmatpush1.msra.mxu0 %v172
    %280 = vmatprep.subr.mxu0 0.0
    %281 = vmatpush1.msra.mxu0 0.0
    %282 = vmatprep.subr.mxu0 0.0
    %283 = vmatpush1.msra.mxu0 0.0
    %284 = vmatprep.subr.mxu0 0.0
    %285 = vmatpush1.msra.mxu0 0.0
    %286 = vmatprep.subr.mxu0 0.0
    %287 = vmatpush1.msra.mxu0 0.0
    %288 = vmatprep.subr.mxu0 0.0
    %289 = vmatpush1.msra.mxu0 0.0
    %290 = vmatprep.subr.mxu0 0.0
    %291 = vmatpush1.msra.mxu0 0.0
    %292 = vmatprep.subr.mxu0 0.0
    %293 = vmatpush1.msra.mxu0 0.0
    %294 = vmatprep.subr.mxu0 0.0
    %295 = vmatpush1.msra.mxu0 0.0
    %296 = vmatprep.subr.mxu0 0.0
    %297 = vmatpush1.msra.mxu0 0.0
    %298 = vmatprep.subr.mxu0 0.0
    %299 = vmatpush1.msra.mxu0 0.0
    %300 = vmatprep.subr.mxu0 0.0
    %301 = vmatpush1.msra.mxu0 0.0
    %302 = vmatprep.subr.mxu0 0.0
    %303 = vmatpush1.msra.mxu0 0.0
    %304 = vmatprep.subr.mxu0 0.0
    %305 = vmatpush1.msra.mxu0 0.0
    %306 = vmatprep.subr.mxu0 0.0
    %307 = vmatpush1.msra.mxu0 0.0
    %308 = vmatprep.subr.mxu0 0.0
    %309 = vmatpush1.msra.mxu0 0.0
    %310 = vmatprep.subr.mxu0 0.0
    %311 = vmatpush1.msra.mxu0 0.0
    %312 = vmatprep.mubr.f32.mxu0 0.0
    %313 = vmatmul.mubr.f32.gmra.mrb[0].mxu0 %v156
    %v314 = vpop.f32.mrb[0].mxu0
    %v315 = vadd.f32 %v245, %v314
    %v316 = vpop.f32.mrb[0].mxu0
    %317 = vdwg.mxu0
    %v318 = vld [vmem:[%s6] sm:$0x1]
    %v320 = vlaneseq
    %v321 = vshrl.u32 %v320, 7
    %v322 = vsub.s32 0, %v321
    %v323 = vrot.slane %v318, %v322
    %v325 = vadd.f32 %v315, %v323
    %v326 = vmax.f32 %v325, 0.0
    %v327 = vld [vmem:[%s7] sm:$0x1]
    %v329 = vlaneseq
    %v330 = vshrl.u32 %v329, 7
    %v331 = vsub.s32 0, %v330
    %v332 = vrot.slane %v327, %v331
    %v334 = vmul.f32 %v326, %v332
    %335 = vadd.xlane.f32.xlu0 %v334
    %v336 = vpop.xlane.xlu0 %335
    %v337 = vld [vmem:[#allocation2] sm:$0x1]
    %v339 = vlaneseq
    %v340 = vshrl.u32 %v339, 7
    %v341 = vsub.s32 0, %v340
    %v342 = vrot.slane %v337, %v341
    %v344 = vadd.f32 %v336, %v342
    %vm345 = vcmask 7168
    %346 = vst.msk [vmem:[%s9] sm:$0xff] %vm345, %v344
    // Predicated region
    $region50: #{critic_forward.1} parent=1 // pred_check
      _
    $region51: #{critic_forward.1} parent=1 // pred_check_branch
      %348 = sbr.rel (0) target = $region53
    $region52: #{critic_forward.1} parent=1 // pred_region
      _
    $region53: #{critic_forward.1} parent=1 // pred_fallthru
      _
    // Predicated region
    $region54: #{critic_forward.1} parent=1 // pred_check
      _
    $region55: #{critic_forward.1} parent=1 // pred_check_branch
      %350 = sbr.rel (0) target = $region57
    $region56: #{critic_forward.1} parent=1 // pred_region
      _
    $region57: #{critic_forward.1} parent=1 // pred_fallthru
      _
    %351 = vsyncpa [#allocation4], 1
    %352 = vsyncpa [#allocation6], 1

</llo_original>
